<compile_context>
chip_gen: v7x
topology: tpu7x:2x2x1
jax: 0.10.0
libtpu: 0.0.40
codegen_flags: <defaults>
</compile_context>

<pallas_src>
import jax
import jax.numpy as jnp
from jax.experimental import pallas as pl
from jax.experimental.pallas import tpu as pltpu


def _largest_divisor_leq(n, limit, multiple_of=1):
    """Largest d with d | n, d <= limit, d % multiple_of == 0 (or None)."""
    best = None
    i = 1
    while i * i <= n:
        if n % i == 0:
            for d in (i, n // i):
                if d <= limit and d % multiple_of == 0 and (best is None or d > best):
                    best = d
        i += 1
    return best


def _vmem_capacity_bytes():
    try:
        cap = int(pltpu.get_tpu_info().vmem_capacity_bytes)
        if cap > 0:
            return cap
    except Exception:
        pass
    return 64 * 1024 * 1024  # conservative fallback: v7x per-TensorCore VMEM


def _copy_kernel(x_ref, o_ref):
    o_ref[...] = x_ref[...]


def _make_lane_repeat_kernel(rank, s_lane, r_lane):
    """Store the input tile r_lane times along the lane axis of the output tile."""
    lead = (slice(None),) * (rank - 1)

    def kernel(x_ref, o_ref):
        x = x_ref[...]
        # r_lane is a small static int -> unrolled full-tile stores (unmasked
        # when s_lane % 128 == 0).
        # TODO(synk): for s_lane % 128 != 0, build the repeated row in vregs
        # (minor-dim concatenate) and issue a single full-width store once
        # unaligned lane concatenation is guaranteed by Mosaic.
        for k in range(r_lane):
            o_ref[lead + (pl.ds(k * s_lane, s_lane),)] = x

    return kernel


def repeat_pallas(x, sizes, *, vmem_budget_bytes=None, vmem_limit_bytes=None):
    """Equivalent of torch.Tensor.repeat(sizes) (== jnp.tile(x, sizes))."""
    sizes = tuple(int(r) for r in sizes)
    if x.ndim > len(sizes):
        raise ValueError("len(sizes) must be >= x.ndim (torch.repeat semantics)")

    s = (1,) * (len(sizes) - x.ndim) + tuple(x.shape)
    out_shape = tuple(si * ri for si, ri in zip(s, sizes))

    # Degenerate / trivial cases.
    if any(d == 0 for d in out_shape):
        return jnp.zeros(out_shape, x.dtype)
    if all(ri == 1 for ri in sizes):
        return x.reshape(out_shape)

    # ---- VMEM sizing, derived per chip generation ----------------------------
    vmem_cap = _vmem_capacity_bytes()
    if vmem_budget_bytes is None:  # bytes of one (input + output) block
        vmem_budget_bytes = min(48 * 1024 * 1024,
                                max(2 * 1024 * 1024, int(vmem_cap * 0.30)))
    if vmem_limit_bytes is None:   # scoped VMEM limit (double buffering included)
        vmem_limit_bytes = min(110 * 1024 * 1024, int(vmem_cap * 0.85))

    itemsize = x.dtype.itemsize

    # ---- canonicalise ---------------------------------------------------------
    # Keep the trailing run of repeat==1 dims as its own unrepeated tail chunk
    # (pure data/lane axis); fold every other repeat==1 dim into its left
    # neighbour (repeating a contiguous chunk).
    k = len(s)
    tail = 1
    while k > 0 and sizes[k - 1] == 1:
        tail *= s[k - 1]
        k -= 1
    dims = []  # [size, repeat]
    for si, ri in zip(s[:k], sizes[:k]):
        if dims and ri == 1:
            dims[-1][0] *= si
        else:
            dims.append([si, ri])
    if tail > 1:
        dims.append([tail, 1])

    s_lane, r_lane = dims[-1]
    # Lane-repeat strategy.
    lane_grid = (r_lane > 1) and (s_lane % 128 == 0) and (s_lane >= 512)

    # ---- expanded view axes ---------------------------------------------------
    axes_in, axes_out, is_rep = [], [], []
    for si, ri in dims[:-1]:
        if ri > 1:
            axes_in.append(1); axes_out.append(ri); is_rep.append(True)
        axes_in.append(si); axes_out.append(si); is_rep.append(False)
    axes_in.append(s_lane); axes_out.append(s_lane * r_lane); is_rep.append(False)
    while len(axes_in) < 3:
        axes_in.insert(0, 1); axes_out.insert(0, 1); is_rep.insert(0, False)
    rank = len(axes_in)
    n_lead = rank - 2

    # ---- block selection (bytes-based, largest divisor that fits) ------------
    # Lane axis.
    if r_lane == 1:
        lane_limit = max(1, vmem_budget_bytes // (2 * itemsize))
        if s_lane <= lane_limit:
            lane_block = s_lane
        else:
            lane_block = (_largest_divisor_leq(s_lane, lane_limit, multiple_of=128)
                          or (128 if s_lane % 128 == 0 else s_lane))
        in_lane_block = out_lane_block = lane_block
        lane_steps = s_lane // lane_block
    else:
        in_lane_block = s_lane
        out_lane_block = s_lane if lane_grid else s_lane * r_lane
        lane_steps = 1
        # TODO(synk): if even 8 * (in+out lane block) * itemsize exceeds VMEM,
        # the lane axis itself would additionally need tiling.
    row_bytes = (in_lane_block + out_lane_block) * itemsize

    # Sublane axis (same size for input and output by construction).
    sub_size = axes_in[rank - 2]
    sub_limit = max(1, vmem_budget_bytes // row_bytes)
    if sub_size <= sub_limit:
        sub_block = sub_size
    else:
        sub_block = (_largest_divisor_leq(sub_size, sub_limit, multiple_of=8)
                     or (8 if sub_size % 8 == 0 else sub_size))
    block_bytes = sub_block * row_bytes

    # Leading axes: repeats are grid-driven (block 1); data axes take the
    # largest divisor of the axis that still fits the budget (no whole-or-1).
    lead_block = [1] * n_lead
    for ax in range(n_lead - 1, -1, -1):
        if is_rep[ax]:
            continue
        limit = max(1, vmem_budget_bytes // block_bytes)
        d = _largest_divisor_leq(axes_in[ax], limit) or 1
        lead_block[ax] = d
        block_bytes *= d

    # Ensure >= 2 grid steps for non-trivial outputs (v7x has 2 TensorCores).
    def _total_steps():
        t = (sub_size // sub_block) * lane_steps * (r_lane if lane_grid else 1)
        for ax in range(n_lead):
            t *= axes_out[ax] if is_rep[ax] else axes_in[ax] // lead_block[ax]
        return t

    out_bytes = itemsize
    for d in axes_out:
        out_bytes *= d
    if _total_steps() < 2 and out_bytes >= 256 * 1024:
        for ax in sorted((a for a in range(n_lead) if not is_rep[a]),
                         key=lambda a: lead_block[a], reverse=True):
            if lead_block[ax] > 1 and lead_block[ax] % 2 == 0:
                lead_block[ax] //= 2
                break
        else:
            if sub_block % 16 == 0:
                sub_block //= 2
            elif r_lane == 1 and in_lane_block % 256 == 0:
                in_lane_block //= 2
                out_lane_block = in_lane_block
                lane_steps = s_lane // in_lane_block

    sub_steps = sub_size // sub_block

    # ---- grid: data-tiled axes slowest, repeat axes fastest -------------------
    grid_axes = []  # (extent, view_axis, is_data)
    for ax in range(n_lead):
        steps = axes_in[ax] // lead_block[ax]
        if not is_rep[ax] and steps > 1:
            grid_axes.append((steps, ax, True))
    if sub_steps > 1:
        grid_axes.append((sub_steps, rank - 2, True))
    if lane_steps > 1:
        grid_axes.append((lane_steps, rank - 1, True))
    for ax in range(n_lead):
        if is_rep[ax]:
            grid_axes.append((axes_out[ax], ax, False))
    if lane_grid:
        grid_axes.append((r_lane, rank - 1, False))
    if not grid_axes:
        grid_axes.append((1, None, True))

    out_ctrl, in_ctrl = {}, {}
    for gi, (_, ax, is_data) in enumerate(grid_axes):
        if ax is None:
            continue
        out_ctrl[ax] = gi
        if is_data:
            in_ctrl[ax] = gi

    def in_index_map(*g):
        return tuple(g[in_ctrl[ax]] if ax in in_ctrl else 0 for ax in range(rank))

    def out_index_map(*g):
        return tuple(g[out_ctrl[ax]] if ax in out_ctrl else 0 for ax in range(rank))

    in_block = tuple(lead_block) + (sub_block, in_lane_block)
    out_block = tuple(lead_block) + (sub_block, out_lane_block)
    grid = tuple(e for e, _, _ in grid_axes)

    if r_lane == 1 or lane_grid:
        kernel = _copy_kernel
    else:
        kernel = _make_lane_repeat_kernel(rank, s_lane, r_lane)

    out_view = pl.pallas_call(
        kernel,
        out_shape=jax.ShapeDtypeStruct(tuple(axes_out), x.dtype),
        grid=grid,
        in_specs=[pl.BlockSpec(in_block, in_index_map)],
        out_specs=pl.BlockSpec(out_block, out_index_map),
        compiler_params=pltpu.CompilerParams(
            dimension_semantics=("parallel",) * len(grid),
            vmem_limit_bytes=int(vmem_limit_bytes),
        ),
    )(x.reshape(tuple(axes_in)))

    # Free row-major reshape back to the torch.repeat output shape.
    return out_view.reshape(out_shape)


if __name__ == "__main__":
    key = jax.random.PRNGKey(0)
    k1, k2, k3, k4 = jax.random.split(key, 4)

    # Main case: NCHW-ish input, repeat along batch / H / W (repeatNet(shape)).
    x = jax.random.normal(k1, (2, 4, 16, 16), dtype=jnp.float32)
    shape = (2, 1, 3, 2)
    y = jax.block_until_ready(repeat_pallas(x, shape))
    y_ref = jnp.tile(x, shape)                 # == torch x.repeat(shape)
    assert y.shape == y_ref.shape == (4, 4, 48, 32)
    assert y.dtype == x.dtype
    assert jnp.array_equal(y, y_ref)

    # Tiny budget -> exercises divisor-based leading blocks + sublane tiling.
    y2 = jax.block_until_ready(repeat_pallas(x, shape, vmem_budget_bytes=2048))
    assert jnp.array_equal(y2, y_ref)

    # len(sizes) > ndim, bf16, 128-aligned lane (unmasked in-kernel lane stores).
    v = jax.random.normal(k2, (8, 128), dtype=jnp.bfloat16)
    y3 = jax.block_until_ready(repeat_pallas(v, (3, 2, 2)))
    assert jnp.array_equal(y3, jnp.tile(v, (3, 2, 2)))

    # Wide aligned lane (>=512): grid-driven lane repeat, pure-copy kernel.
    w = jax.random.normal(k3, (8, 512), dtype=jnp.float32)
    y4 = jax.block_until_ready(repeat_pallas(w, (2, 3)))
    assert jnp.array_equal(y4, jnp.tile(w, (2, 3)))

    # Trailing repeat==1 dims stay pure data axes (copy kernel, grid repeats).
    u = jax.random.normal(k4, (4, 8, 32), dtype=jnp.float32)
    y5 = jax.block_until_ready(repeat_pallas(u, (3, 2, 1, 1)))
    assert jnp.array_equal(y5, jnp.tile(u, (3, 2, 1, 1)))

    print("KERNEL_OK")
</pallas_src>

<mosaic_0001>
module attributes {stable_mosaic.version = 11 : i64} {
  func.func @kernel(%arg0: i32, %arg1: i32, %arg2: memref<1x8x1x16x16xf32, #tpu.memory_space<vmem>>, %arg3: memref<1x8x1x16x32xf32, #tpu.memory_space<vmem>>) attributes {dimension_semantics = [#tpu.dimension_semantics<parallel>, #tpu.dimension_semantics<parallel>], iteration_bounds = array<i64: 2, 3>, scalar_prefetch = 0 : i64, scratch_operands = 0 : i64, tpu.core_type = #tpu.core_type<tc>, window_params = [{pipeline_mode = #tpu.pipeline_mode<synchronous>, transform_indices = @transform_0, window_bounds = array<i64: 1, 8, 1, 16, 16>}, {transform_indices = @transform_1, window_bounds = array<i64: 1, 8, 1, 16, 32>}]} {
    %c0 = arith.constant 0 : index
    %c0_0 = arith.constant 0 : index
    %c0_1 = arith.constant 0 : index
    %c0_2 = arith.constant 0 : index
    %c0_3 = arith.constant 0 : index
    %0 = vector.load %arg2[%c0, %c0_0, %c0_1, %c0_2, %c0_3] : memref<1x8x1x16x16xf32, #tpu.memory_space<vmem>>, vector<1x8x1x16x16xf32>
    %c0_4 = arith.constant 0 : index
    %c0_5 = arith.constant 0 : index
    %c0_6 = arith.constant 0 : index
    %c0_7 = arith.constant 0 : index
    %c0_8 = arith.constant 0 : index
    %1 = vector.load %arg3[%c0_4, %c0_5, %c0_6, %c0_7, %c0_8] : memref<1x8x1x16x32xf32, #tpu.memory_space<vmem>>, vector<1x8x1x16x16xf32>
    tpu.vector_store %arg3[%c0_4, %c0_5, %c0_6, %c0_7, %c0_8], %0 {strides = array<i32>} : memref<1x8x1x16x32xf32, #tpu.memory_space<vmem>>, vector<1x8x1x16x16xf32>,
    %c0_9 = arith.constant 0 : index
    %c0_10 = arith.constant 0 : index
    %c0_11 = arith.constant 0 : index
    %c0_12 = arith.constant 0 : index
    %c16 = arith.constant 16 : index
    %2 = vector.load %arg3[%c0_9, %c0_10, %c0_11, %c0_12, %c16] : memref<1x8x1x16x32xf32, #tpu.memory_space<vmem>>, vector<1x8x1x16x16xf32>
    tpu.vector_store %arg3[%c0_9, %c0_10, %c0_11, %c0_12, %c16], %0 {strides = array<i32>} : memref<1x8x1x16x32xf32, #tpu.memory_space<vmem>>, vector<1x8x1x16x16xf32>,
    return
  }
  func.func @transform_0(%arg0: i32, %arg1: i32) -> (i32, i32, i32, i32, i32) {
    %c0_i32 = arith.constant 0 : i32
    %c0_i32_0 = arith.constant 0 : i32
    %c0_i32_1 = arith.constant 0 : i32
    %c0_i32_2 = arith.constant 0 : i32
    %c0_i32_3 = arith.constant 0 : i32
    %c0_i32_4 = arith.constant 0 : i32
    return %c0_i32, %c0_i32_0, %c0_i32_1, %c0_i32_2, %c0_i32_3 : i32, i32, i32, i32, i32
  }
  func.func @transform_1(%arg0: i32, %arg1: i32) -> (i32, i32, i32, i32, i32) {
    %c0_i32 = arith.constant 0 : i32
    %c0_i32_0 = arith.constant 0 : i32
    %c0_i32_1 = arith.constant 0 : i32
    %c0_i32_2 = arith.constant 0 : i32
    return %arg0, %c0_i32, %arg1, %c0_i32_0, %c0_i32_1 : i32, i32, i32, i32, i32
  }
}

</mosaic_0001>

<llo_original>
// kernel: tpu_custom_call.1
$region0: #{tpu_custom_call.1}
  #allocation0 [shape = 'u32[]', space=smem, size = 0x4, offset = 0x4, fixed_abs, tag = 'smem constant byte address 0x4 - core index']
  #allocation1 [shape = 'u32[144,128]{1,0:T(1,128)}', space=vmem, size = 0x12000, scoped, tag = 'internal scratch']
  #allocation6 [shape = 's32[]', space=sflag, size = 0x4, offset = 0, fixed_abs, tag = 'sflag constant byte address 0x0 - dummy sync flag']
  %s0 = inlined_call_operand.hbm [shape: f32[1,8,1,16,16], index: 0, kind: input, shape index: {}]
  %s1 = inlined_call_operand.hbm [shape: f32[2,8,3,16,32], index: 1, kind: output, shape index: {}]
  %s2 = sld [smem:[#allocation0]]
  $region41: #{tpu_custom_call.1} parent=0
    _
  %s4 = ssub.s32 1, %s2
  %s5 = scalar_select 0, %s4, %s2
  $region1: #{tpu_custom_call.1} parent=0
    #allocation2 [shape = 'u8[65536]{0}', space=vmem, size = 0x10000, scoped, tag = 'input window, operand 0, single buffered']
    #allocation3 [shape = 's32[2]{0}', space=sflag, size = 0x8, scoped, tag = 'scoped memory for tpu_custom_call.1']
    #allocation4 [shape = 's32[2]{0}', space=sflag, size = 0x8, scoped, tag = 'scoped memory for tpu_custom_call.1']
    #allocation5 [shape = 'u8[131072]{0}', space=vmem, size = 0x20000, scoped, tag = 'output window, operand 0']
    %6 = vsyncpa [#allocation3], 0
    %7 = vsyncpa [#allocation4], 0
    %s8 = scalar_lea.sflag [#allocation4], 1
    %9 = vsyncpa %s8, 0
    loop: start=0, step=1, limit=8
    $region2: #{tpu_custom_call.1} parent=1 // loop_pre_header
      _
    $region3: #{tpu_custom_call.1} parent=1 // loop_header
      %s11 = sphi 0, %s15
      %p12 = scmp.ge.s32.totalorder %s11, 8
      %s18 = sphi 0, %s30
      %s19 = sphi 0, %s26
      %s20 = sphi 0, %s18
      %s21 = sphi 0, %s19
      %s22 = sphi 0, %s20
      %s23 = sphi 0, %s21
      %s31 = sphi 0, %s31
      %s33 = sphi 0, %s31
      %s34 = sphi 0, %s33
      %s48 = sphi 0, %s34
      %s56 = sphi 0, %s58
      %s59 = sphi 0, %s56
      %s60 = sphi 0, %s59
      %s76 = sphi 0, %s60
    $region4: #{tpu_custom_call.1} parent=1 // loop_header_branch
      %14 = sbr.rel (%p12) target = $region8
    $region5: #{tpu_custom_call.1} parent=1 // loop_body
      %s16 = ssub.s32 %s11, 1
      %s17 = ssub.s32 %s11, 2
      %s24 = sadd.s32 1, %s19
      %p25 = scmp.ge.s32.totalorder %s24, 3
      %s26 = scalar_select %p25, 0, %s24
      %s27 = sadd.s32 1, %s18
      %s28 = scalar_select %p25, %s27, %s18
      %p29 = scmp.ge.s32.totalorder %s28, 2
      %s30 = scalar_select %p29, 0, %s28
      %s32 = sadd.s32 %s31, 1
      %p35 = scmp.eq.s32.totalorder %s11, 5
      %p36 = scmp.ne.s32.totalorder %s31, %s33
      %p37 = scmp.eq.s32.totalorder %s11, 0
      %p38 = por %p36, %p37
      %p39 = scmp.ne.s32.totalorder %s31, %s33
      %p40 = scmp.eq.s32.totalorder %s16, 5
      %p41 = por %p39, %p40
      %p42 = scmp.ne.s32.totalorder %s33, %s34
      %p43 = scmp.eq.s32.totalorder %s16, 0
      %p44 = por %p42, %p43
      %p45 = scmp.ne.s32.totalorder %s33, %s34
      %p46 = scmp.eq.s32.totalorder %s17, 5
      %p47 = por %p45, %p46
      %p49 = scmp.ne.s32.totalorder %s34, %s48
      %p50 = scmp.eq.s32.totalorder %s17, 0
      %p51 = por %p49, %p50
      %s52 = ssub.s32 %s18, %s30
      %s53 = ssub.s32 %s19, %s26
      %s54 = sor.u32 %s52, %s53
      %p55 = scmp.eq.s32.totalorder %s54, 0
      %s57 = sadd.s32 %s56, 1
      %s58 = scalar_select %p55, %s56, %s57
      %p61 = pneg %p55
      %p62 = scmp.eq.s32.totalorder %s11, 5
      %p63 = por %p61, %p62
      %p64 = scmp.ne.s32.totalorder %s56, %s59
      %p65 = scmp.eq.s32.totalorder %s11, 0
      %p66 = por %p64, %p65
      %p67 = scmp.ne.s32.totalorder %s56, %s59
      %p68 = scmp.eq.s32.totalorder %s16, 5
      %p69 = por %p67, %p68
      %p70 = scmp.ne.s32.totalorder %s59, %s60
      %p71 = scmp.eq.s32.totalorder %s16, 0
      %p72 = por %p70, %p71
      %p73 = scmp.ne.s32.totalorder %s59, %s60
      %p74 = scmp.eq.s32.totalorder %s17, 5
      %p75 = por %p73, %p74
      %p77 = scmp.ne.s32.totalorder %s60, %s76
      %p78 = scmp.eq.s32.totalorder %s17, 0
      %p79 = por %p77, %p78
      %p80 = scmp.le.s32.totalorder 1, %s11
      %p81 = scmp.lt.s32.totalorder %s11, 7
      %p82 = pnand %p80, %p81
      %p83 = pneg %p82
      // Predicated region
      $region9: #{tpu_custom_call.1} parent=5 // pred_check
        _
      $region10: #{tpu_custom_call.1} parent=5 // pred_check_branch
        %85 = sbr.rel (%p82) target = $region12
      $region11: #{tpu_custom_call.1} parent=5 // pred_region
        %s86 = ssub.s32 %s11, 1
        // Predicated region
        $region13: #{tpu_custom_call.1} parent=11 // pred_check
          %p87 = pneg %p44
        $region14: #{tpu_custom_call.1} parent=11 // pred_check_branch
          %89 = sbr.rel (%p87) target = $region16
        $region15: #{tpu_custom_call.1} parent=11 // pred_region
          %s91 = ssub.s32 2048, 2048
          %92 = vsyncadd [#allocation3], %s91
          %s93 = sshll.u32 [#allocation2], 4
          %s94 = int_to_ptr.vmem [resolvable:$true] %s93
          %99 = dma.hbm_to_vmem [thread:$0]  %s0, 2048, %s94, [#allocation3], 128, 128, 8
        $region16: #{tpu_custom_call.1} parent=11 // pred_fallthru
          _
      $region12: #{tpu_custom_call.1} parent=5 // pred_fallthru
        _
      %p100 = scmp.lt.s32.totalorder %s11, 6
      // Predicated region
      $region17: #{tpu_custom_call.1} parent=5 // pred_check
        %p101 = pneg %p100
      $region18: #{tpu_custom_call.1} parent=5 // pred_check_branch
        %103 = sbr.rel (%p101) target = $region20
      $region19: #{tpu_custom_call.1} parent=5 // pred_region
        _
      $region20: #{tpu_custom_call.1} parent=5 // pred_fallthru
        _
      %p104 = scmp.le.s32.totalorder 1, %s11
      %p105 = scmp.lt.s32.totalorder %s11, 7
      %p106 = pnand %p104, %p105
      %p107 = pneg %p106
      // Predicated region
      $region21: #{tpu_custom_call.1} parent=5 // pred_check
        _
      $region22: #{tpu_custom_call.1} parent=5 // pred_check_branch
        %109 = sbr.rel (%p106) target = $region24
      $region23: #{tpu_custom_call.1} parent=5 // pred_region
        %s110 = ssub.s32 %s11, 1
        // Predicated region
        $region25: #{tpu_custom_call.1} parent=23 // pred_check
          %p111 = pneg %p44
        $region26: #{tpu_custom_call.1} parent=23 // pred_check_branch
          %113 = sbr.rel (%p111) target = $region28
        $region27: #{tpu_custom_call.1} parent=23 // pred_region
          %114 = dma.done [#allocation3], 2048
        $region28: #{tpu_custom_call.1} parent=23 // pred_fallthru
          _
        %p115 = pneg %p44
        %p116 = pneg %p41
        %p117 = pneg %p72
        %p118 = pneg %p69
        %s119 = sand.u32 %s59, 1
        %s120 = scalar_lea.sflag [#allocation4], %s119
        %s121 = sand.u32 %s59, 1
        %s122 = smul.addr %s121, 128
        %s123 = scalar_lea.vmem [#allocation5], %s122
        %v124 = vld [vmem:[#allocation2] sm:$0xff]
        %v125 = vld [vmem:[#allocation2 + $0x8] sm:$0xff]
        %v126 = vld [vmem:[#allocation2 + $0x10] sm:$0xff]
        %v127 = vld [vmem:[#allocation2 + $0x18] sm:$0xff]
        %v128 = vld [vmem:[#allocation2 + $0x20] sm:$0xff]
        %v129 = vld [vmem:[#allocation2 + $0x28] sm:$0xff]
        %v130 = vld [vmem:[#allocation2 + $0x30] sm:$0xff]
        %v131 = vld [vmem:[#allocation2 + $0x38] sm:$0xff]
        %v132 = vld [vmem:[#allocation2 + $0x40] sm:$0xff]
        %v133 = vld [vmem:[#allocation2 + $0x48] sm:$0xff]
        %v134 = vld [vmem:[#allocation2 + $0x50] sm:$0xff]
        %v135 = vld [vmem:[#allocation2 + $0x58] sm:$0xff]
        %v136 = vld [vmem:[#allocation2 + $0x60] sm:$0xff]
        %v137 = vld [vmem:[#allocation2 + $0x68] sm:$0xff]
        %v138 = vld [vmem:[#allocation2 + $0x70] sm:$0xff]
        %v139 = vld [vmem:[#allocation2 + $0x78] sm:$0xff]
        %vm140 = vcmask 130048
        %141 = vst.msk [vmem:[%s123] sm:$0xff] %vm140, %v124
        %142 = vst.msk [vmem:[%s123 + $0x8] sm:$0xff] %vm140, %v125
        %143 = vst.msk [vmem:[%s123 + $0x10] sm:$0xff] %vm140, %v126
        %144 = vst.msk [vmem:[%s123 + $0x18] sm:$0xff] %vm140, %v127
        %145 = vst.msk [vmem:[%s123 + $0x20] sm:$0xff] %vm140, %v128
        %146 = vst.msk [vmem:[%s123 + $0x28] sm:$0xff] %vm140, %v129
        %147 = vst.msk [vmem:[%s123 + $0x30] sm:$0xff] %vm140, %v130
        %148 = vst.msk [vmem:[%s123 + $0x38] sm:$0xff] %vm140, %v131
        %149 = vst.msk [vmem:[%s123 + $0x40] sm:$0xff] %vm140, %v132
        %150 = vst.msk [vmem:[%s123 + $0x48] sm:$0xff] %vm140, %v133
        %151 = vst.msk [vmem:[%s123 + $0x50] sm:$0xff] %vm140, %v134
        %152 = vst.msk [vmem:[%s123 + $0x58] sm:$0xff] %vm140, %v135
        %153 = vst.msk [vmem:[%s123 + $0x60] sm:$0xff] %vm140, %v136
        %154 = vst.msk [vmem:[%s123 + $0x68] sm:$0xff] %vm140, %v137
        %155 = vst.msk [vmem:[%s123 + $0x70] sm:$0xff] %vm140, %v138
        %156 = vst.msk [vmem:[%s123 + $0x78] sm:$0xff] %vm140, %v139
        %173 = vrot.lane.b32.xlu0 %v124, 16
        %v174 = vpop.permute.xlu0 %173
        %175 = vrot.lane.b32.xlu0 %v125, 16
        %v176 = vpop.permute.xlu0 %175
        %177 = vrot.lane.b32.xlu0 %v126, 16
        %v178 = vpop.permute.xlu0 %177
        %179 = vrot.lane.b32.xlu0 %v127, 16
        %v180 = vpop.permute.xlu0 %179
        %181 = vrot.lane.b32.xlu0 %v128, 16
        %v182 = vpop.permute.xlu0 %181
        %183 = vrot.lane.b32.xlu0 %v129, 16
        %v184 = vpop.permute.xlu0 %183
        %185 = vrot.lane.b32.xlu0 %v130, 16
        %v186 = vpop.permute.xlu0 %185
        %187 = vrot.lane.b32.xlu0 %v131, 16
        %v188 = vpop.permute.xlu0 %187
        %189 = vrot.lane.b32.xlu0 %v132, 16
        %v190 = vpop.permute.xlu0 %189
        %191 = vrot.lane.b32.xlu0 %v133, 16
        %v192 = vpop.permute.xlu0 %191
        %193 = vrot.lane.b32.xlu0 %v134, 16
        %v194 = vpop.permute.xlu0 %193
        %195 = vrot.lane.b32.xlu0 %v135, 16
        %v196 = vpop.permute.xlu0 %195
        %197 = vrot.lane.b32.xlu0 %v136, 16
        %v198 = vpop.permute.xlu0 %197
        %199 = vrot.lane.b32.xlu0 %v137, 16
        %v200 = vpop.permute.xlu0 %199
        %201 = vrot.lane.b32.xlu0 %v138, 16
        %v202 = vpop.permute.xlu0 %201
        %203 = vrot.lane.b32.xlu0 %v139, 16
        %v204 = vpop.permute.xlu0 %203
        %vm221 = vcmask 261248
        %222 = vst.msk [vmem:[%s123] sm:$0xff] %vm221, %v174
        %223 = vst.msk [vmem:[%s123 + $0x8] sm:$0xff] %vm221, %v176
        %224 = vst.msk [vmem:[%s123 + $0x10] sm:$0xff] %vm221, %v178
        %225 = vst.msk [vmem:[%s123 + $0x18] sm:$0xff] %vm221, %v180
        %226 = vst.msk [vmem:[%s123 + $0x20] sm:$0xff] %vm221, %v182
        %227 = vst.msk [vmem:[%s123 + $0x28] sm:$0xff] %vm221, %v184
        %228 = vst.msk [vmem:[%s123 + $0x30] sm:$0xff] %vm221, %v186
        %229 = vst.msk [vmem:[%s123 + $0x38] sm:$0xff] %vm221, %v188
        %230 = vst.msk [vmem:[%s123 + $0x40] sm:$0xff] %vm221, %v190
        %231 = vst.msk [vmem:[%s123 + $0x48] sm:$0xff] %vm221, %v192
        %232 = vst.msk [vmem:[%s123 + $0x50] sm:$0xff] %vm221, %v194
        %233 = vst.msk [vmem:[%s123 + $0x58] sm:$0xff] %vm221, %v196
        %234 = vst.msk [vmem:[%s123 + $0x60] sm:$0xff] %vm221, %v198
        %235 = vst.msk [vmem:[%s123 + $0x68] sm:$0xff] %vm221, %v200
        %236 = vst.msk [vmem:[%s123 + $0x70] sm:$0xff] %vm221, %v202
        %237 = vst.msk [vmem:[%s123 + $0x78] sm:$0xff] %vm221, %v204
        %s238 = sand.u32 %s59, 1
        %s239 = scalar_lea.sflag [#allocation4], %s238
        %s240 = sand.u32 %s59, 1
        %s241 = smul.addr %s240, 128
        %s242 = scalar_lea.vmem [#allocation5], %s241
        // Predicated region
        $region29: #{tpu_custom_call.1} parent=23 // pred_check
          %p243 = pneg %p69
        $region30: #{tpu_custom_call.1} parent=23 // pred_check_branch
          %245 = sbr.rel (%p243) target = $region32
        $region31: #{tpu_custom_call.1} parent=23 // pred_region
          #allocation7 [shape = 'u32[6]{0}', space=smem, size = 0x18, scoped, tag = 'DMA stride descriptor']
          %s247 = ssub.s32 2048, 2048
          %248 = vsyncadd %s239, %s247
          %s249 = smul.addr %s21, 2
          %s250 = smul.addr %s20, 48
          %s251 = sadd.s32 %s249, %s250
          %s252 = smul.addr %s251, 128
          %s253 = scalar_lea.hbm %s1, %s252
          %s255 = sshll.u32 1, 14
          %s256 = sxor.u32 4294967295, %s255
          %s259 = sshll.u32 7, 18
          %s260 = sxor.u32 4294967295, %s259
          %s261 = sand.u32 0, %s260
          %s263 = sor.u32 %s261, 0
          %s265 = sshll.u32 3, 24
          %s266 = sxor.u32 4294967295, %s265
          %s267 = sand.u32 %s263, %s266
          %s269 = sor.u32 %s267, 0
          %s270 = sshll.u32 %s242, 4
          %s271 = int_to_ptr.vmem [resolvable:$true] %s270
          %277 = sst [smem:[#allocation7]] 256
          %s278 = scalar_lea.smem [#allocation7], 1
          %279 = sst [smem:[%s278]] 768
          %s280 = scalar_lea.smem [#allocation7], 2
          %281 = sst [smem:[%s280]] 2
          %s282 = scalar_lea.smem [#allocation7], 3
          %283 = sst [smem:[%s282]] 128
          %s284 = scalar_lea.smem [#allocation7], 4
          %285 = sst [smem:[%s284]] 128
          %s286 = scalar_lea.smem [#allocation7], 5
          %287 = sst [smem:[%s286]] 8
          %289 = dma.general %s271, 2048, %s253, %s239, [#allocation6], [#allocation7], %s269, 0
        $region32: #{tpu_custom_call.1} parent=23 // pred_fallthru
          _
      $region24: #{tpu_custom_call.1} parent=5 // pred_fallthru
        _
      %p290 = scmp.le.s32.totalorder 2, %s11
      // Predicated region
      $region33: #{tpu_custom_call.1} parent=5 // pred_check
        %p291 = pneg %p290
      $region34: #{tpu_custom_call.1} parent=5 // pred_check_branch
        %293 = sbr.rel (%p291) target = $region36
      $region35: #{tpu_custom_call.1} parent=5 // pred_region
        %s294 = ssub.s32 %s11, 2
        // Predicated region
        $region37: #{tpu_custom_call.1} parent=35 // pred_check
          %p295 = pneg %p75
        $region38: #{tpu_custom_call.1} parent=35 // pred_check_branch
          %297 = sbr.rel (%p295) target = $region40
        $region39: #{tpu_custom_call.1} parent=35 // pred_region
          %s298 = sand.u32 %s60, 1
          %s299 = scalar_lea.sflag [#allocation4], %s298
          %s300 = sand.u32 %s60, 1
          %s301 = smul.addr %s300, 128
          %s302 = scalar_lea.vmem [#allocation5], %s301
          %303 = dma.done %s299, 2048
        $region40: #{tpu_custom_call.1} parent=35 // pred_fallthru
          _
      $region36: #{tpu_custom_call.1} parent=5 // pred_fallthru
        _
    $region6: #{tpu_custom_call.1} parent=1 // loop_footer
      %s15 = sadd.s32 1, %s11
    $region7: #{tpu_custom_call.1} parent=1 // loop_footer_branch
      %10 = sbr.rel target = $region3
    $region8: #{tpu_custom_call.1} parent=1 // loop_exit
      _
    %304 = vsyncpa [#allocation3], 1
    %s305 = scalar_lea.sflag [#allocation3], 1
    %306 = vsyncpa %s305, 1
    %307 = vsyncpa [#allocation4], 1
    %s308 = scalar_lea.sflag [#allocation4], 1
    %309 = vsyncpa %s308, 1

</llo_original>
